<compile_context>
chip_gen: v7x
topology: tpu7x:2x2x1
jax: 0.10.0
libtpu: 0.0.40
codegen_flags: <defaults>
</compile_context>

<pallas_src>
import functools

import jax
import jax.numpy as jnp
from jax import lax
from jax.experimental import pallas as pl
from jax.experimental.pallas import tpu as pltpu


INPUT_DIM = 64           # args.max_input_dim
RECON_LAMBDA = 0.5       # args.reconstruction_lambda
ENC_DIMS = (INPUT_DIM, 128, 64, 32)
DEC_DIMS = (32, 64, 128, INPUT_DIM)
LATENT_DIM = ENC_DIMS[-1]


def _round_up(n, m):
    return (n + m - 1) // m * m


def _ae_kernel(loss_scale,
               x_ref,
               w1_ref, b1_ref, w2_ref, b2_ref, w3_ref, b3_ref,
               w34_ref, b34_ref, w5_ref, b5_ref, w6_ref, b6_ref,
               latent_ref, loss_ref):
    x = x_ref[...].astype(jnp.float32)

    # ---- encoder: Linear -> tanh -> Linear -> tanh ----
    h = jnp.tanh(jnp.dot(x, w1_ref[...], preferred_element_type=jnp.float32)
                 + b1_ref[...])
    h = jnp.tanh(jnp.dot(h, w2_ref[...], preferred_element_type=jnp.float32)
                 + b2_ref[...])

    # latent output (encoder's last Linear) and the decoder's first layer are
    # both computed from h; w34/b34 fold (Linear(64,32) o Linear(32,64)) so the
    # decoder does not wait on the latent matmul.
    latent = jnp.dot(h, w3_ref[...], preferred_element_type=jnp.float32) + b3_ref[...]
    d = jnp.tanh(jnp.dot(h, w34_ref[...], preferred_element_type=jnp.float32)
                 + b34_ref[...])

    # ---- rest of decoder ----
    d = jnp.tanh(jnp.dot(d, w5_ref[...], preferred_element_type=jnp.float32)
                 + b5_ref[...])
    decoded = jnp.dot(d, w6_ref[...], preferred_element_type=jnp.float32) + b6_ref[...]

    # ---- reconstruction loss: lambda * mean((x - decoded)^2, axis=-1) ----
    diff = x - decoded
    sq = diff * diff                                        # (bm, D)
    ones_row = jnp.ones((1, x.shape[1]), jnp.float32)       # (1, D)
    # ones(1,D) @ sq.T  -> (1, bm) row of per-example sums, directly lane-dense.
    loss_row = lax.dot_general(ones_row, sq, (((1,), (1,)), ((), ())),
                               preferred_element_type=jnp.float32) * loss_scale

    latent_ref[...] = latent.astype(latent_ref.dtype)
    loss_ref[...] = loss_row.astype(loss_ref.dtype)


def linear_layer_auto_encoder(x, params, *, recon_lambda=RECON_LAMBDA, bm=512):
    """x: (B, INPUT_DIM) float32. params: dict of weights/biases.

    Returns (latent (B, 32), reconstruction_loss (B,)).
    """
    B, D = x.shape
    assert D == INPUT_DIM

    # ---- batch tile selection + zero padding (handles arbitrary B) ----
    if B <= bm:
        bm_eff = max(8, _round_up(B, 8))
        b_pad = bm_eff
    else:
        assert bm % 128 == 0, "bm must be a multiple of 128 for lane-dense loss"
        bm_eff = bm
        b_pad = _round_up(B, bm_eff)
    if b_pad != B:
        x_p = jnp.zeros((b_pad, D), x.dtype).at[:B].set(x)
    else:
        x_p = x
    grid = b_pad // bm_eff

    w1, b1 = params["w1"], params["b1"]
    w2, b2 = params["w2"], params["b2"]
    w3, b3 = params["w3"], params["b3"]
    w4, b4 = params["w4"], params["b4"]
    w5, b5 = params["w5"], params["b5"]
    w6, b6 = params["w6"], params["b6"]

    # Host-side fusion of the encoder/decoder boundary.
    w34 = jnp.dot(w3, w4)            # (64, 64)
    b34 = jnp.dot(b3, w4) + b4       # (1, 64)

    full = lambda a: pl.BlockSpec(a.shape, lambda i: (0, 0))

    latent, loss = pl.pallas_call(
        functools.partial(_ae_kernel, recon_lambda / D),
        out_shape=(
            jax.ShapeDtypeStruct((b_pad, LATENT_DIM), jnp.float32),
            jax.ShapeDtypeStruct((1, b_pad), jnp.float32),
        ),
        grid_spec=pltpu.PrefetchScalarGridSpec(
            num_scalar_prefetch=0,
            grid=(grid,),
            in_specs=[
                pl.BlockSpec((bm_eff, D), lambda i: (i, 0)),
                full(w1), full(b1), full(w2), full(b2), full(w3), full(b3),
                full(w34), full(b34), full(w5), full(b5), full(w6), full(b6),
            ],
            out_specs=[
                pl.BlockSpec((bm_eff, LATENT_DIM), lambda i: (i, 0)),
                pl.BlockSpec((1, bm_eff), lambda i: (0, i)),
            ],
        ),
        compiler_params=pltpu.CompilerParams(
            dimension_semantics=("parallel",),
            vmem_limit_bytes=32 * 1024 * 1024,
        ),
    )(x_p, w1, b1, w2, b2, w3, b3, w34, b34, w5, b5, w6, b6)

    return latent[:B], loss[0, :B]


def init_params(key):
    """Deterministic init mimicking PyTorch nn.Linear default U[-1/sqrt(in), 1/sqrt(in)]."""
    dims = [
        (ENC_DIMS[0], ENC_DIMS[1]),  # w1
        (ENC_DIMS[1], ENC_DIMS[2]),  # w2
        (ENC_DIMS[2], ENC_DIMS[3]),  # w3
        (DEC_DIMS[0], DEC_DIMS[1]),  # w4
        (DEC_DIMS[1], DEC_DIMS[2]),  # w5
        (DEC_DIMS[2], DEC_DIMS[3]),  # w6
    ]
    params = {}
    keys = jax.random.split(key, 2 * len(dims))
    for idx, (fan_in, fan_out) in enumerate(dims):
        bound = 1.0 / (fan_in ** 0.5)
        w = jax.random.uniform(keys[2 * idx], (fan_in, fan_out),
                               minval=-bound, maxval=bound, dtype=jnp.float32)
        b = jax.random.uniform(keys[2 * idx + 1], (1, fan_out),
                               minval=-bound, maxval=bound, dtype=jnp.float32)
        params[f"w{idx + 1}"] = w
        params[f"b{idx + 1}"] = b
    return params


def _reference(x, params, recon_lambda=RECON_LAMBDA):
    h = jnp.tanh(x @ params["w1"] + params["b1"])
    h = jnp.tanh(h @ params["w2"] + params["b2"])
    latent = h @ params["w3"] + params["b3"]
    d = jnp.tanh(latent @ params["w4"] + params["b4"])
    d = jnp.tanh(d @ params["w5"] + params["b5"])
    decoded = d @ params["w6"] + params["b6"]
    loss = jnp.mean((x - decoded) ** 2 * recon_lambda, axis=-1)
    return latent, loss


if __name__ == "__main__":
    key = jax.random.PRNGKey(0)
    pkey, xkey = jax.random.split(key)
    params = init_params(pkey)

    # --- small single-tile check ---
    batch = 8
    x = jax.random.normal(xkey, (batch, INPUT_DIM), dtype=jnp.float32)
    latent, loss = linear_layer_auto_encoder(x, params)
    jax.block_until_ready((latent, loss))
    ref_latent, ref_loss = _reference(x, params)
    assert latent.shape == (batch, LATENT_DIM) and loss.shape == (batch,)
    assert jnp.allclose(latent, ref_latent, atol=1e-4, rtol=1e-4)
    assert jnp.allclose(loss, ref_loss, atol=1e-4, rtol=1e-4)

    # --- multi-tile, lane-dense, ragged-batch path (B=300, bm=128 -> grid=3 w/ padding) ---
    batch2 = 300
    x2 = jax.random.normal(jax.random.PRNGKey(1), (batch2, INPUT_DIM), dtype=jnp.float32)
    latent2, loss2 = linear_layer_auto_encoder(x2, params, bm=128)
    jax.block_until_ready((latent2, loss2))
    ref_latent2, ref_loss2 = _reference(x2, params)
    assert latent2.shape == (batch2, LATENT_DIM) and loss2.shape == (batch2,)
    assert jnp.allclose(latent2, ref_latent2, atol=1e-4, rtol=1e-4)
    assert jnp.allclose(loss2, ref_loss2, atol=1e-4, rtol=1e-4)

    print("KERNEL_OK")
</pallas_src>

<mosaic_0001>
module attributes {stable_mosaic.version = 11 : i64} {
  func.func @_ae_kernel(%arg0: i32, %arg1: memref<8x64xf32, #tpu.memory_space<vmem>>, %arg2: memref<64x128xf32, #tpu.memory_space<vmem>>, %arg3: memref<1x128xf32, #tpu.memory_space<vmem>>, %arg4: memref<128x64xf32, #tpu.memory_space<vmem>>, %arg5: memref<1x64xf32, #tpu.memory_space<vmem>>, %arg6: memref<64x32xf32, #tpu.memory_space<vmem>>, %arg7: memref<1x32xf32, #tpu.memory_space<vmem>>, %arg8: memref<64x64xf32, #tpu.memory_space<vmem>>, %arg9: memref<1x64xf32, #tpu.memory_space<vmem>>, %arg10: memref<64x128xf32, #tpu.memory_space<vmem>>, %arg11: memref<1x128xf32, #tpu.memory_space<vmem>>, %arg12: memref<128x64xf32, #tpu.memory_space<vmem>>, %arg13: memref<1x64xf32, #tpu.memory_space<vmem>>, %arg14: memref<8x32xf32, #tpu.memory_space<vmem>>, %arg15: memref<1x8xf32, #tpu.memory_space<vmem>>) attributes {dimension_semantics = [#tpu.dimension_semantics<parallel>], iteration_bounds = array<i64: 1>, scalar_prefetch = 0 : i64, scratch_operands = 0 : i64, tpu.core_type = #tpu.core_type<tc>, window_params = [{transform_indices = @transform_0, window_bounds = array<i64: 8, 64>}, {pipeline_mode = #tpu.pipeline_mode<synchronous>, transform_indices = @transform_1, window_bounds = array<i64: 64, 128>}, {pipeline_mode = #tpu.pipeline_mode<synchronous>, transform_indices = @transform_2, window_bounds = array<i64: 1, 128>}, {pipeline_mode = #tpu.pipeline_mode<synchronous>, transform_indices = @transform_3, window_bounds = array<i64: 128, 64>}, {pipeline_mode = #tpu.pipeline_mode<synchronous>, transform_indices = @transform_4, window_bounds = array<i64: 1, 64>}, {pipeline_mode = #tpu.pipeline_mode<synchronous>, transform_indices = @transform_5, window_bounds = array<i64: 64, 32>}, {pipeline_mode = #tpu.pipeline_mode<synchronous>, transform_indices = @transform_6, window_bounds = array<i64: 1, 32>}, {pipeline_mode = #tpu.pipeline_mode<synchronous>, transform_indices = @transform_7, window_bounds = array<i64: 64, 64>}, {pipeline_mode = #tpu.pipeline_mode<synchronous>, transform_indices = @transform_8, window_bounds = array<i64: 1, 64>}, {pipeline_mode = #tpu.pipeline_mode<synchronous>, transform_indices = @transform_9, window_bounds = array<i64: 64, 128>}, {pipeline_mode = #tpu.pipeline_mode<synchronous>, transform_indices = @transform_10, window_bounds = array<i64: 1, 128>}, {pipeline_mode = #tpu.pipeline_mode<synchronous>, transform_indices = @transform_11, window_bounds = array<i64: 128, 64>}, {pipeline_mode = #tpu.pipeline_mode<synchronous>, transform_indices = @transform_12, window_bounds = array<i64: 1, 64>}, {transform_indices = @transform_13, window_bounds = array<i64: 8, 32>}, {transform_indices = @transform_14, window_bounds = array<i64: 1, 8>}]} {
    %c0 = arith.constant 0 : index
    %c0_0 = arith.constant 0 : index
    %0 = vector.load %arg1[%c0, %c0_0] : memref<8x64xf32, #tpu.memory_space<vmem>>, vector<8x64xf32>
    %c0_1 = arith.constant 0 : index
    %c0_2 = arith.constant 0 : index
    %1 = vector.load %arg2[%c0_1, %c0_2] : memref<64x128xf32, #tpu.memory_space<vmem>>, vector<64x128xf32>
    %cst = arith.constant dense<0.000000e+00> : vector<8x128xf32>
    %2 = tpu.matmul %0, %1, %cst {dimension_numbers = #tpu.dot_dimension_numbers<[1], [0], [0], [1], [0, 0, 1, 1], [], []>} : vector<8x64xf32>, vector<64x128xf32>, vector<8x128xf32> -> vector<8x128xf32>
    %c0_3 = arith.constant 0 : index
    %c0_4 = arith.constant 0 : index
    %3 = vector.load %arg3[%c0_3, %c0_4] : memref<1x128xf32, #tpu.memory_space<vmem>>, vector<1x128xf32>
    %4 = vector.broadcast %3 : vector<1x128xf32> to vector<8x128xf32>
    %5 = arith.addf %2, %4 : vector<8x128xf32>
    %6 = math.tanh %5 : vector<8x128xf32>
    %c0_5 = arith.constant 0 : index
    %c0_6 = arith.constant 0 : index
    %7 = vector.load %arg4[%c0_5, %c0_6] : memref<128x64xf32, #tpu.memory_space<vmem>>, vector<128x64xf32>
    %cst_7 = arith.constant dense<0.000000e+00> : vector<8x64xf32>
    %8 = tpu.matmul %6, %7, %cst_7 {dimension_numbers = #tpu.dot_dimension_numbers<[1], [0], [0], [1], [0, 0, 1, 1], [], []>} : vector<8x128xf32>, vector<128x64xf32>, vector<8x64xf32> -> vector<8x64xf32>
    %c0_8 = arith.constant 0 : index
    %c0_9 = arith.constant 0 : index
    %9 = vector.load %arg5[%c0_8, %c0_9] : memref<1x64xf32, #tpu.memory_space<vmem>>, vector<1x64xf32>
    %10 = vector.broadcast %9 : vector<1x64xf32> to vector<8x64xf32>
    %11 = arith.addf %8, %10 : vector<8x64xf32>
    %12 = math.tanh %11 : vector<8x64xf32>
    %c0_10 = arith.constant 0 : index
    %c0_11 = arith.constant 0 : index
    %13 = vector.load %arg6[%c0_10, %c0_11] : memref<64x32xf32, #tpu.memory_space<vmem>>, vector<64x32xf32>
    %cst_12 = arith.constant dense<0.000000e+00> : vector<8x32xf32>
    %14 = tpu.matmul %12, %13, %cst_12 {dimension_numbers = #tpu.dot_dimension_numbers<[1], [0], [0], [1], [0, 0, 1, 1], [], []>} : vector<8x64xf32>, vector<64x32xf32>, vector<8x32xf32> -> vector<8x32xf32>
    %c0_13 = arith.constant 0 : index
    %c0_14 = arith.constant 0 : index
    %15 = vector.load %arg7[%c0_13, %c0_14] : memref<1x32xf32, #tpu.memory_space<vmem>>, vector<1x32xf32>
    %16 = vector.broadcast %15 : vector<1x32xf32> to vector<8x32xf32>
    %17 = arith.addf %14, %16 : vector<8x32xf32>
    %c0_15 = arith.constant 0 : index
    %c0_16 = arith.constant 0 : index
    %18 = vector.load %arg8[%c0_15, %c0_16] : memref<64x64xf32, #tpu.memory_space<vmem>>, vector<64x64xf32>
    %cst_17 = arith.constant dense<0.000000e+00> : vector<8x64xf32>
    %19 = tpu.matmul %12, %18, %cst_17 {dimension_numbers = #tpu.dot_dimension_numbers<[1], [0], [0], [1], [0, 0, 1, 1], [], []>} : vector<8x64xf32>, vector<64x64xf32>, vector<8x64xf32> -> vector<8x64xf32>
    %c0_18 = arith.constant 0 : index
    %c0_19 = arith.constant 0 : index
    %20 = vector.load %arg9[%c0_18, %c0_19] : memref<1x64xf32, #tpu.memory_space<vmem>>, vector<1x64xf32>
    %21 = vector.broadcast %20 : vector<1x64xf32> to vector<8x64xf32>
    %22 = arith.addf %19, %21 : vector<8x64xf32>
    %23 = math.tanh %22 : vector<8x64xf32>
    %c0_20 = arith.constant 0 : index
    %c0_21 = arith.constant 0 : index
    %24 = vector.load %arg10[%c0_20, %c0_21] : memref<64x128xf32, #tpu.memory_space<vmem>>, vector<64x128xf32>
    %cst_22 = arith.constant dense<0.000000e+00> : vector<8x128xf32>
    %25 = tpu.matmul %23, %24, %cst_22 {dimension_numbers = #tpu.dot_dimension_numbers<[1], [0], [0], [1], [0, 0, 1, 1], [], []>} : vector<8x64xf32>, vector<64x128xf32>, vector<8x128xf32> -> vector<8x128xf32>
    %c0_23 = arith.constant 0 : index
    %c0_24 = arith.constant 0 : index
    %26 = vector.load %arg11[%c0_23, %c0_24] : memref<1x128xf32, #tpu.memory_space<vmem>>, vector<1x128xf32>
    %27 = vector.broadcast %26 : vector<1x128xf32> to vector<8x128xf32>
    %28 = arith.addf %25, %27 : vector<8x128xf32>
    %29 = math.tanh %28 : vector<8x128xf32>
    %c0_25 = arith.constant 0 : index
    %c0_26 = arith.constant 0 : index
    %30 = vector.load %arg12[%c0_25, %c0_26] : memref<128x64xf32, #tpu.memory_space<vmem>>, vector<128x64xf32>
    %cst_27 = arith.constant dense<0.000000e+00> : vector<8x64xf32>
    %31 = tpu.matmul %29, %30, %cst_27 {dimension_numbers = #tpu.dot_dimension_numbers<[1], [0], [0], [1], [0, 0, 1, 1], [], []>} : vector<8x128xf32>, vector<128x64xf32>, vector<8x64xf32> -> vector<8x64xf32>
    %c0_28 = arith.constant 0 : index
    %c0_29 = arith.constant 0 : index
    %32 = vector.load %arg13[%c0_28, %c0_29] : memref<1x64xf32, #tpu.memory_space<vmem>>, vector<1x64xf32>
    %33 = vector.broadcast %32 : vector<1x64xf32> to vector<8x64xf32>
    %34 = arith.addf %31, %33 : vector<8x64xf32>
    %35 = arith.subf %0, %34 : vector<8x64xf32>
    %36 = arith.mulf %35, %35 : vector<8x64xf32>
    %cst_30 = arith.constant 1.000000e+00 : f32
    %37 = vector.broadcast %cst_30 : f32 to vector<1x64xf32>
    %cst_31 = arith.constant dense<0.000000e+00> : vector<1x8xf32>
    %38 = tpu.matmul %37, %36, %cst_31 {dimension_numbers = #tpu.dot_dimension_numbers<[1], [1], [0], [0], [0, 0, 1, 0], [], []>} : vector<1x64xf32>, vector<8x64xf32>, vector<1x8xf32> -> vector<1x8xf32>
    %cst_32 = arith.constant 7.812500e-03 : f32
    %39 = vector.broadcast %cst_32 : f32 to vector<1x8xf32>
    %40 = arith.mulf %38, %39 : vector<1x8xf32>
    %c0_33 = arith.constant 0 : index
    %c0_34 = arith.constant 0 : index
    %41 = vector.load %arg14[%c0_33, %c0_34] : memref<8x32xf32, #tpu.memory_space<vmem>>, vector<8x32xf32>
    tpu.vector_store %arg14[%c0_33, %c0_34], %17 {strides = array<i32>} : memref<8x32xf32, #tpu.memory_space<vmem>>, vector<8x32xf32>,
    %c0_35 = arith.constant 0 : index
    %c0_36 = arith.constant 0 : index
    %42 = vector.load %arg15[%c0_35, %c0_36] : memref<1x8xf32, #tpu.memory_space<vmem>>, vector<1x8xf32>
    tpu.vector_store %arg15[%c0_35, %c0_36], %40 {strides = array<i32>} : memref<1x8xf32, #tpu.memory_space<vmem>>, vector<1x8xf32>,
    return
  }
  func.func @transform_0(%arg0: i32) -> (i32, i32) {
    %c0_i32 = arith.constant 0 : i32
    %c0_i32_0 = arith.constant 0 : i32
    return %arg0, %c0_i32 : i32, i32
  }
  func.func @transform_1(%arg0: i32) -> (i32, i32) {
    %c0_i32 = arith.constant 0 : i32
    %c0_i32_0 = arith.constant 0 : i32
    %c0_i32_1 = arith.constant 0 : i32
    return %c0_i32, %c0_i32_0 : i32, i32
  }
  func.func @transform_2(%arg0: i32) -> (i32, i32) {
    %c0_i32 = arith.constant 0 : i32
    %c0_i32_0 = arith.constant 0 : i32
    %c0_i32_1 = arith.constant 0 : i32
    return %c0_i32, %c0_i32_0 : i32, i32
  }
  func.func @transform_3(%arg0: i32) -> (i32, i32) {
    %c0_i32 = arith.constant 0 : i32
    %c0_i32_0 = arith.constant 0 : i32
    %c0_i32_1 = arith.constant 0 : i32
    return %c0_i32, %c0_i32_0 : i32, i32
  }
  func.func @transform_4(%arg0: i32) -> (i32, i32) {
    %c0_i32 = arith.constant 0 : i32
    %c0_i32_0 = arith.constant 0 : i32
    %c0_i32_1 = arith.constant 0 : i32
    return %c0_i32, %c0_i32_0 : i32, i32
  }
  func.func @transform_5(%arg0: i32) -> (i32, i32) {
    %c0_i32 = arith.constant 0 : i32
    %c0_i32_0 = arith.constant 0 : i32
    %c0_i32_1 = arith.constant 0 : i32
    return %c0_i32, %c0_i32_0 : i32, i32
  }
  func.func @transform_6(%arg0: i32) -> (i32, i32) {
    %c0_i32 = arith.constant 0 : i32
    %c0_i32_0 = arith.constant 0 : i32
    %c0_i32_1 = arith.constant 0 : i32
    return %c0_i32, %c0_i32_0 : i32, i32
  }
  func.func @transform_7(%arg0: i32) -> (i32, i32) {
    %c0_i32 = arith.constant 0 : i32
    %c0_i32_0 = arith.constant 0 : i32
    %c0_i32_1 = arith.constant 0 : i32
    return %c0_i32, %c0_i32_0 : i32, i32
  }
  func.func @transform_8(%arg0: i32) -> (i32, i32) {
    %c0_i32 = arith.constant 0 : i32
    %c0_i32_0 = arith.constant 0 : i32
    %c0_i32_1 = arith.constant 0 : i32
    return %c0_i32, %c0_i32_0 : i32, i32
  }
  func.func @transform_9(%arg0: i32) -> (i32, i32) {
    %c0_i32 = arith.constant 0 : i32
    %c0_i32_0 = arith.constant 0 : i32
    %c0_i32_1 = arith.constant 0 : i32
    return %c0_i32, %c0_i32_0 : i32, i32
  }
  func.func @transform_10(%arg0: i32) -> (i32, i32) {
    %c0_i32 = arith.constant 0 : i32
    %c0_i32_0 = arith.constant 0 : i32
    %c0_i32_1 = arith.constant 0 : i32
    return %c0_i32, %c0_i32_0 : i32, i32
  }
  func.func @transform_11(%arg0: i32) -> (i32, i32) {
    %c0_i32 = arith.constant 0 : i32
    %c0_i32_0 = arith.constant 0 : i32
    %c0_i32_1 = arith.constant 0 : i32
    return %c0_i32, %c0_i32_0 : i32, i32
  }
  func.func @transform_12(%arg0: i32) -> (i32, i32) {
    %c0_i32 = arith.constant 0 : i32
    %c0_i32_0 = arith.constant 0 : i32
    %c0_i32_1 = arith.constant 0 : i32
    return %c0_i32, %c0_i32_0 : i32, i32
  }
  func.func @transform_13(%arg0: i32) -> (i32, i32) {
    %c0_i32 = arith.constant 0 : i32
    %c0_i32_0 = arith.constant 0 : i32
    return %arg0, %c0_i32 : i32, i32
  }
  func.func @transform_14(%arg0: i32) -> (i32, i32) {
    %c0_i32 = arith.constant 0 : i32
    %c0_i32_0 = arith.constant 0 : i32
    return %c0_i32, %arg0 : i32, i32
  }
}

</mosaic_0001>

<llo_original>
// kernel: tpu_custom_call.1
$region0: #{tpu_custom_call.1}
  #allocation0 [shape = 'u32[]', space=smem, size = 0x4, offset = 0x4, fixed_abs, tag = 'smem constant byte address 0x4 - core index']
  #allocation1 [shape = 'u32[144,128]{1,0:T(1,128)}', space=vmem, size = 0x12000, scoped, tag = 'internal scratch']
  %s0 = inlined_call_operand.vmem [shape: f32[8,64], index: 0, kind: input, shape index: {}]
  %s1 = inlined_call_operand.vmem [shape: f32[64,128], index: 1, kind: input, shape index: {}]
  %s2 = inlined_call_operand.vmem [shape: f32[1,128], index: 2, kind: input, shape index: {}]
  %s3 = inlined_call_operand.vmem [shape: f32[128,64], index: 3, kind: input, shape index: {}]
  %s4 = inlined_call_operand.vmem [shape: f32[1,64], index: 4, kind: input, shape index: {}]
  %s5 = inlined_call_operand.vmem [shape: f32[64,32], index: 5, kind: input, shape index: {}]
  %s6 = inlined_call_operand.vmem [shape: f32[1,32], index: 6, kind: input, shape index: {}]
  %s7 = inlined_call_operand.vmem [shape: f32[64,64], index: 7, kind: input, shape index: {}]
  %s8 = inlined_call_operand.vmem [shape: f32[1,64], index: 8, kind: input, shape index: {}]
  %s9 = inlined_call_operand.vmem [shape: f32[64,128], index: 9, kind: input, shape index: {}]
  %s10 = inlined_call_operand.vmem [shape: f32[1,128], index: 10, kind: input, shape index: {}]
  %s11 = inlined_call_operand.vmem [shape: f32[128,64], index: 11, kind: input, shape index: {}]
  %s12 = inlined_call_operand.vmem [shape: f32[1,64], index: 12, kind: input, shape index: {}]
  %s13 = inlined_call_operand.hbm [shape: f32[8,32], index: 13, kind: output, shape index: {0}]
  %s14 = inlined_call_operand.hbm [shape: f32[1,8], index: 14, kind: output, shape index: {1}]
  %15 = xla_tuple %s13, %s14
  %s16 = sld [smem:[#allocation0]]
  $region70: #{tpu_custom_call.1} parent=0
    _
  %s18 = ssub.s32 1, %s16
  %s19 = scalar_select 0, %s18, %s16
  $region1: #{tpu_custom_call.1} parent=0
    #allocation2 [shape = 'u8[4096]{0}', space=vmem, size = 0x1000, scoped, tag = 'output window, operand 0, single buffered']
    #allocation3 [shape = 's32[1]{0}', space=sflag, size = 0x4, scoped, tag = 'scoped memory for tpu_custom_call.1']
    #allocation4 [shape = 'u8[512]{0}', space=vmem, size = 0x400, scoped, tag = 'output window, operand 1, single buffered']
    #allocation5 [shape = 's32[1]{0}', space=sflag, size = 0x4, scoped, tag = 'scoped memory for tpu_custom_call.1']
    %20 = vsyncpa [#allocation3], 0
    %21 = vsyncpa [#allocation5], 0
    // Predicated region
    $region2: #{tpu_custom_call.1} parent=1 // pred_check
      _
    $region3: #{tpu_custom_call.1} parent=1 // pred_check_branch
      %23 = sbr.rel (0) target = $region5
    $region4: #{tpu_custom_call.1} parent=1 // pred_region
      _
    $region5: #{tpu_custom_call.1} parent=1 // pred_fallthru
      _
    // Predicated region
    $region6: #{tpu_custom_call.1} parent=1 // pred_check
      _
    $region7: #{tpu_custom_call.1} parent=1 // pred_check_branch
      %25 = sbr.rel (0) target = $region9
    $region8: #{tpu_custom_call.1} parent=1 // pred_region
      _
    $region9: #{tpu_custom_call.1} parent=1 // pred_fallthru
      _
    // Predicated region
    $region10: #{tpu_custom_call.1} parent=1 // pred_check
      _
    $region11: #{tpu_custom_call.1} parent=1 // pred_check_branch
      %27 = sbr.rel (0) target = $region13
    $region12: #{tpu_custom_call.1} parent=1 // pred_region
      _
    $region13: #{tpu_custom_call.1} parent=1 // pred_fallthru
      _
    // Predicated region
    $region14: #{tpu_custom_call.1} parent=1 // pred_check
      _
    $region15: #{tpu_custom_call.1} parent=1 // pred_check_branch
      %29 = sbr.rel (0) target = $region17
    $region16: #{tpu_custom_call.1} parent=1 // pred_region
      _
    $region17: #{tpu_custom_call.1} parent=1 // pred_fallthru
      _
    // Predicated region
    $region18: #{tpu_custom_call.1} parent=1 // pred_check
      _
    $region19: #{tpu_custom_call.1} parent=1 // pred_check_branch
      %31 = sbr.rel (0) target = $region21
    $region20: #{tpu_custom_call.1} parent=1 // pred_region
      _
    $region21: #{tpu_custom_call.1} parent=1 // pred_fallthru
      _
    // Predicated region
    $region22: #{tpu_custom_call.1} parent=1 // pred_check
      _
    $region23: #{tpu_custom_call.1} parent=1 // pred_check_branch
      %33 = sbr.rel (0) target = $region25
    $region24: #{tpu_custom_call.1} parent=1 // pred_region
      _
    $region25: #{tpu_custom_call.1} parent=1 // pred_fallthru
      _
    // Predicated region
    $region26: #{tpu_custom_call.1} parent=1 // pred_check
      _
    $region27: #{tpu_custom_call.1} parent=1 // pred_check_branch
      %35 = sbr.rel (0) target = $region29
    $region28: #{tpu_custom_call.1} parent=1 // pred_region
      _
    $region29: #{tpu_custom_call.1} parent=1 // pred_fallthru
      _
    // Predicated region
    $region30: #{tpu_custom_call.1} parent=1 // pred_check
      _
    $region31: #{tpu_custom_call.1} parent=1 // pred_check_branch
      %37 = sbr.rel (0) target = $region33
    $region32: #{tpu_custom_call.1} parent=1 // pred_region
      _
    $region33: #{tpu_custom_call.1} parent=1 // pred_fallthru
      _
    // Predicated region
    $region34: #{tpu_custom_call.1} parent=1 // pred_check
      _
    $region35: #{tpu_custom_call.1} parent=1 // pred_check_branch
      %39 = sbr.rel (0) target = $region37
    $region36: #{tpu_custom_call.1} parent=1 // pred_region
      _
    $region37: #{tpu_custom_call.1} parent=1 // pred_fallthru
      _
    // Predicated region
    $region38: #{tpu_custom_call.1} parent=1 // pred_check
      _
    $region39: #{tpu_custom_call.1} parent=1 // pred_check_branch
      %41 = sbr.rel (0) target = $region41
    $region40: #{tpu_custom_call.1} parent=1 // pred_region
      _
    $region41: #{tpu_custom_call.1} parent=1 // pred_fallthru
      _
    // Predicated region
    $region42: #{tpu_custom_call.1} parent=1 // pred_check
      _
    $region43: #{tpu_custom_call.1} parent=1 // pred_check_branch
      %43 = sbr.rel (0) target = $region45
    $region44: #{tpu_custom_call.1} parent=1 // pred_region
      _
    $region45: #{tpu_custom_call.1} parent=1 // pred_fallthru
      _
    // Predicated region
    $region46: #{tpu_custom_call.1} parent=1 // pred_check
      _
    $region47: #{tpu_custom_call.1} parent=1 // pred_check_branch
      %45 = sbr.rel (0) target = $region49
    $region48: #{tpu_custom_call.1} parent=1 // pred_region
      _
    $region49: #{tpu_custom_call.1} parent=1 // pred_fallthru
      _
    // Predicated region
    $region50: #{tpu_custom_call.1} parent=1 // pred_check
      _
    $region51: #{tpu_custom_call.1} parent=1 // pred_check_branch
      %47 = sbr.rel (0) target = $region53
    $region52: #{tpu_custom_call.1} parent=1 // pred_region
      _
    $region53: #{tpu_custom_call.1} parent=1 // pred_fallthru
      _
    %v48 = vld [vmem:[%s0] sm:$0xff]
    %v49 = vld [vmem:[%s1] sm:$0xff]
    %v50 = vld [vmem:[%s1 + $0x8] sm:$0xff]
    %v51 = vld [vmem:[%s1 + $0x10] sm:$0xff]
    %v52 = vld [vmem:[%s1 + $0x18] sm:$0xff]
    %v53 = vld [vmem:[%s1 + $0x20] sm:$0xff]
    %v54 = vld [vmem:[%s1 + $0x28] sm:$0xff]
    %v55 = vld [vmem:[%s1 + $0x30] sm:$0xff]
    %v56 = vld [vmem:[%s1 + $0x38] sm:$0xff]
    %v57 = vld [vmem:[%s2] sm:$0x1]
    %v59 = vlaneseq
    %v60 = vshrl.u32 %v59, 7
    %v61 = vsub.s32 0, %v60
    %v62 = vrot.slane %v57, %v61
    %vm64 = vcmask 523264
    %v66 = vsel %vm64, %v48, 0
    %68 = vmatprep.subr.mxu0 0.0
    %69 = vmatpush1.msra.mxu0 %v49
    %70 = vmatprep.subr.mxu0 0.0
    %71 = vmatpush1.msra.mxu0 %v50
    %72 = vmatprep.subr.mxu0 0.0
    %73 = vmatpush1.msra.mxu0 %v51
    %74 = vmatprep.subr.mxu0 0.0
    %75 = vmatpush1.msra.mxu0 %v52
    %76 = vmatprep.subr.mxu0 0.0
    %77 = vmatpush1.msra.mxu0 %v53
    %78 = vmatprep.subr.mxu0 0.0
    %79 = vmatpush1.msra.mxu0 %v54
    %80 = vmatprep.subr.mxu0 0.0
    %81 = vmatpush1.msra.mxu0 %v55
    %82 = vmatprep.subr.mxu0 0.0
    %83 = vmatpush1.msra.mxu0 %v56
    %84 = vmatprep.subr.mxu0 0.0
    %85 = vmatpush1.msra.mxu0 0.0
    %86 = vmatprep.subr.mxu0 0.0
    %87 = vmatpush1.msra.mxu0 0.0
    %88 = vmatprep.subr.mxu0 0.0
    %89 = vmatpush1.msra.mxu0 0.0
    %90 = vmatprep.subr.mxu0 0.0
    %91 = vmatpush1.msra.mxu0 0.0
    %92 = vmatprep.subr.mxu0 0.0
    %93 = vmatpush1.msra.mxu0 0.0
    %94 = vmatprep.subr.mxu0 0.0
    %95 = vmatpush1.msra.mxu0 0.0
    %96 = vmatprep.subr.mxu0 0.0
    %97 = vmatpush1.msra.mxu0 0.0
    %98 = vmatprep.subr.mxu0 0.0
    %99 = vmatpush1.msra.mxu0 0.0
    %100 = vmatprep.subr.mxu0 0.0
    %101 = vmatpush1.msra.mxu0 0.0
    %102 = vmatprep.subr.mxu0 0.0
    %103 = vmatpush1.msra.mxu0 0.0
    %104 = vmatprep.subr.mxu0 0.0
    %105 = vmatpush1.msra.mxu0 0.0
    %106 = vmatprep.subr.mxu0 0.0
    %107 = vmatpush1.msra.mxu0 0.0
    %108 = vmatprep.subr.mxu0 0.0
    %109 = vmatpush1.msra.mxu0 0.0
    %110 = vmatprep.subr.mxu0 0.0
    %111 = vmatpush1.msra.mxu0 0.0
    %112 = vmatprep.subr.mxu0 0.0
    %113 = vmatpush1.msra.mxu0 0.0
    %114 = vmatprep.subr.mxu0 0.0
    %115 = vmatpush1.msra.mxu0 0.0
    %116 = vmatprep.subr.mxu0 0.0
    %117 = vmatpush1.msra.mxu0 0.0
    %118 = vmatprep.subr.mxu0 0.0
    %119 = vmatpush1.msra.mxu0 0.0
    %120 = vmatprep.subr.mxu0 0.0
    %121 = vmatpush1.msra.mxu0 0.0
    %122 = vmatprep.subr.mxu0 0.0
    %123 = vmatpush1.msra.mxu0 0.0
    %124 = vmatprep.subr.mxu0 0.0
    %125 = vmatpush1.msra.mxu0 0.0
    %126 = vmatprep.subr.mxu0 0.0
    %127 = vmatpush1.msra.mxu0 0.0
    %128 = vmatprep.subr.mxu0 0.0
    %129 = vmatpush1.msra.mxu0 0.0
    %130 = vmatprep.subr.mxu0 0.0
    %131 = vmatpush1.msra.mxu0 0.0
    %132 = vmatprep.mubr.f32.mxu0 0.0
    %133 = vmatmul.mubr.f32.gmra.mrb[0].mxu0 %v66
    %v134 = vpop.f32.mrb[0].mxu0
    %v135 = vadd.f32 %v62, %v134
    %v136 = vpop.f32.mrb[0].mxu0
    %137 = vdwg.mxu0
    %v138 = vtanh.pop %v135
    %v139 = vld [vmem:[%s3] sm:$0xff]
    %v140 = vld [vmem:[%s3 + $0x8] sm:$0xff]
    %v141 = vld [vmem:[%s3 + $0x10] sm:$0xff]
    %v142 = vld [vmem:[%s3 + $0x18] sm:$0xff]
    %v143 = vld [vmem:[%s3 + $0x20] sm:$0xff]
    %v144 = vld [vmem:[%s3 + $0x28] sm:$0xff]
    %v145 = vld [vmem:[%s3 + $0x30] sm:$0xff]
    %v146 = vld [vmem:[%s3 + $0x38] sm:$0xff]
    %v147 = vld [vmem:[%s3 + $0x40] sm:$0xff]
    %v148 = vld [vmem:[%s3 + $0x48] sm:$0xff]
    %v149 = vld [vmem:[%s3 + $0x50] sm:$0xff]
    %v150 = vld [vmem:[%s3 + $0x58] sm:$0xff]
    %v151 = vld [vmem:[%s3 + $0x60] sm:$0xff]
    %v152 = vld [vmem:[%s3 + $0x68] sm:$0xff]
    %v153 = vld [vmem:[%s3 + $0x70] sm:$0xff]
    %v154 = vld [vmem:[%s3 + $0x78] sm:$0xff]
    %v155 = vld [vmem:[%s4] sm:$0x1]
    %v157 = vlaneseq
    %v158 = vshrl.u32 %v157, 7
    %v159 = vsub.s32 0, %v158
    %v160 = vrot.slane %v155, %v159
    %162 = vmatprep.subr.mxu0 0.0
    %163 = vmatpush1.msra.mxu0 %v139
    %164 = vmatprep.subr.mxu0 0.0
    %165 = vmatpush1.msra.mxu0 %v140
    %166 = vmatprep.subr.mxu0 0.0
    %167 = vmatpush1.msra.mxu0 %v141
    %168 = vmatprep.subr.mxu0 0.0
    %169 = vmatpush1.msra.mxu0 %v142
    %170 = vmatprep.subr.mxu0 0.0
    %171 = vmatpush1.msra.mxu0 %v143
    %172 = vmatprep.subr.mxu0 0.0
    %173 = vmatpush1.msra.mxu0 %v144
    %174 = vmatprep.subr.mxu0 0.0
    %175 = vmatpush1.msra.mxu0 %v145
    %176 = vmatprep.subr.mxu0 0.0
    %177 = vmatpush1.msra.mxu0 %v146
    %178 = vmatprep.subr.mxu0 0.0
    %179 = vmatpush1.msra.mxu0 %v147
    %180 = vmatprep.subr.mxu0 0.0
    %181 = vmatpush1.msra.mxu0 %v148
    %182 = vmatprep.subr.mxu0 0.0
    %183 = vmatpush1.msra.mxu0 %v149
    %184 = vmatprep.subr.mxu0 0.0
    %185 = vmatpush1.msra.mxu0 %v150
    %186 = vmatprep.subr.mxu0 0.0
    %187 = vmatpush1.msra.mxu0 %v151
    %188 = vmatprep.subr.mxu0 0.0
    %189 = vmatpush1.msra.mxu0 %v152
    %190 = vmatprep.subr.mxu0 0.0
    %191 = vmatpush1.msra.mxu0 %v153
    %192 = vmatprep.subr.mxu0 0.0
    %193 = vmatpush1.msra.mxu0 %v154
    %194 = vmatprep.subr.mxu0 0.0
    %195 = vmatpush1.msra.mxu0 0.0
    %196 = vmatprep.subr.mxu0 0.0
    %197 = vmatpush1.msra.mxu0 0.0
    %198 = vmatprep.subr.mxu0 0.0
    %199 = vmatpush1.msra.mxu0 0.0
    %200 = vmatprep.subr.mxu0 0.0
    %201 = vmatpush1.msra.mxu0 0.0
    %202 = vmatprep.subr.mxu0 0.0
    %203 = vmatpush1.msra.mxu0 0.0
    %204 = vmatprep.subr.mxu0 0.0
    %205 = vmatpush1.msra.mxu0 0.0
    %206 = vmatprep.subr.mxu0 0.0
    %207 = vmatpush1.msra.mxu0 0.0
    %208 = vmatprep.subr.mxu0 0.0
    %209 = vmatpush1.msra.mxu0 0.0
    %210 = vmatprep.subr.mxu0 0.0
    %211 = vmatpush1.msra.mxu0 0.0
    %212 = vmatprep.subr.mxu0 0.0
    %213 = vmatpush1.msra.mxu0 0.0
    %214 = vmatprep.subr.mxu0 0.0
    %215 = vmatpush1.msra.mxu0 0.0
    %216 = vmatprep.subr.mxu0 0.0
    %217 = vmatpush1.msra.mxu0 0.0
    %218 = vmatprep.subr.mxu0 0.0
    %219 = vmatpush1.msra.mxu0 0.0
    %220 = vmatprep.subr.mxu0 0.0
    %221 = vmatpush1.msra.mxu0 0.0
    %222 = vmatprep.subr.mxu0 0.0
    %223 = vmatpush1.msra.mxu0 0.0
    %224 = vmatprep.subr.mxu0 0.0
    %225 = vmatpush1.msra.mxu0 0.0
    %226 = vmatprep.mubr.f32.mxu0 0.0
    %227 = vmatmul.mubr.f32.gmra.mrb[0].mxu0 %v138
    %v228 = vpop.f32.mrb[0].mxu0
    %v229 = vadd.f32 %v160, %v228
    %v230 = vpop.f32.mrb[0].mxu0
    %231 = vdwg.mxu0
    %v232 = vtanh.pop %v229
    %v233 = vld [vmem:[%s5] sm:$0xff]
    %v234 = vld [vmem:[%s5 + $0x8] sm:$0xff]
    %v235 = vld [vmem:[%s5 + $0x10] sm:$0xff]
    %v236 = vld [vmem:[%s5 + $0x18] sm:$0xff]
    %v237 = vld [vmem:[%s5 + $0x20] sm:$0xff]
    %v238 = vld [vmem:[%s5 + $0x28] sm:$0xff]
    %v239 = vld [vmem:[%s5 + $0x30] sm:$0xff]
    %v240 = vld [vmem:[%s5 + $0x38] sm:$0xff]
    %v241 = vld [vmem:[%s6] sm:$0x1]
    %v243 = vlaneseq
    %v244 = vshrl.u32 %v243, 7
    %v245 = vsub.s32 0, %v244
    %v246 = vrot.slane %v241, %v245
    %v249 = vsel %vm64, %v232, 0
    %251 = vmatprep.subr.mxu0 0.0
    %252 = vmatpush1.msra.mxu0 %v233
    %253 = vmatprep.subr.mxu0 0.0
    %254 = vmatpush1.msra.mxu0 %v234
    %255 = vmatprep.subr.mxu0 0.0
    %256 = vmatpush1.msra.mxu0 %v235
    %257 = vmatprep.subr.mxu0 0.0
    %258 = vmatpush1.msra.mxu0 %v236
    %259 = vmatprep.subr.mxu0 0.0
    %260 = vmatpush1.msra.mxu0 %v237
    %261 = vmatprep.subr.mxu0 0.0
    %262 = vmatpush1.msra.mxu0 %v238
    %263 = vmatprep.subr.mxu0 0.0
    %264 = vmatpush1.msra.mxu0 %v239
    %265 = vmatprep.subr.mxu0 0.0
    %266 = vmatpush1.msra.mxu0 %v240
    %267 = vmatprep.subr.mxu0 0.0
    %268 = vmatpush1.msra.mxu0 0.0
    %269 = vmatprep.subr.mxu0 0.0
    %270 = vmatpush1.msra.mxu0 0.0
    %271 = vmatprep.subr.mxu0 0.0
    %272 = vmatpush1.msra.mxu0 0.0
    %273 = vmatprep.subr.mxu0 0.0
    %274 = vmatpush1.msra.mxu0 0.0
    %275 = vmatprep.subr.mxu0 0.0
    %276 = vmatpush1.msra.mxu0 0.0
    %277 = vmatprep.subr.mxu0 0.0
    %278 = vmatpush1.msra.mxu0 0.0
    %279 = vmatprep.subr.mxu0 0.0
    %280 = vmatpush1.msra.mxu0 0.0
    %281 = vmatprep.subr.mxu0 0.0
    %282 = vmatpush1.msra.mxu0 0.0
    %283 = vmatprep.subr.mxu0 0.0
    %284 = vmatpush1.msra.mxu0 0.0
    %285 = vmatprep.subr.mxu0 0.0
    %286 = vmatpush1.msra.mxu0 0.0
    %287 = vmatprep.subr.mxu0 0.0
    %288 = vmatpush1.msra.mxu0 0.0
    %289 = vmatprep.subr.mxu0 0.0
    %290 = vmatpush1.msra.mxu0 0.0
    %291 = vmatprep.subr.mxu0 0.0
    %292 = vmatpush1.msra.mxu0 0.0
    %293 = vmatprep.subr.mxu0 0.0
    %294 = vmatpush1.msra.mxu0 0.0
    %295 = vmatprep.subr.mxu0 0.0
    %296 = vmatpush1.msra.mxu0 0.0
    %297 = vmatprep.subr.mxu0 0.0
    %298 = vmatpush1.msra.mxu0 0.0
    %299 = vmatprep.subr.mxu0 0.0
    %300 = vmatpush1.msra.mxu0 0.0
    %301 = vmatprep.subr.mxu0 0.0
    %302 = vmatpush1.msra.mxu0 0.0
    %303 = vmatprep.subr.mxu0 0.0
    %304 = vmatpush1.msra.mxu0 0.0
    %305 = vmatprep.subr.mxu0 0.0
    %306 = vmatpush1.msra.mxu0 0.0
    %307 = vmatprep.subr.mxu0 0.0
    %308 = vmatpush1.msra.mxu0 0.0
    %309 = vmatprep.subr.mxu0 0.0
    %310 = vmatpush1.msra.mxu0 0.0
    %311 = vmatprep.subr.mxu0 0.0
    %312 = vmatpush1.msra.mxu0 0.0
    %313 = vmatprep.subr.mxu0 0.0
    %314 = vmatpush1.msra.mxu0 0.0
    %315 = vmatprep.mubr.f32.mxu0 0.0
    %316 = vmatmul.mubr.f32.gmra.mrb[0].mxu0 %v249
    %v317 = vpop.f32.mrb[0].mxu0
    %v318 = vadd.f32 %v246, %v317
    %v319 = vpop.f32.mrb[0].mxu0
    %320 = vdwg.mxu0
    %v321 = vld [vmem:[%s7] sm:$0xff]
    %v322 = vld [vmem:[%s7 + $0x8] sm:$0xff]
    %v323 = vld [vmem:[%s7 + $0x10] sm:$0xff]
    %v324 = vld [vmem:[%s7 + $0x18] sm:$0xff]
    %v325 = vld [vmem:[%s7 + $0x20] sm:$0xff]
    %v326 = vld [vmem:[%s7 + $0x28] sm:$0xff]
    %v327 = vld [vmem:[%s7 + $0x30] sm:$0xff]
    %v328 = vld [vmem:[%s7 + $0x38] sm:$0xff]
    %v329 = vld [vmem:[%s8] sm:$0x1]
    %v331 = vlaneseq
    %v332 = vshrl.u32 %v331, 7
    %v333 = vsub.s32 0, %v332
    %v334 = vrot.slane %v329, %v333
    %336 = vmatprep.subr.mxu0 0.0
    %337 = vmatpush1.msra.mxu0 %v321
    %338 = vmatprep.subr.mxu0 0.0
    %339 = vmatpush1.msra.mxu0 %v322
    %340 = vmatprep.subr.mxu0 0.0
    %341 = vmatpush1.msra.mxu0 %v323
    %342 = vmatprep.subr.mxu0 0.0
    %343 = vmatpush1.msra.mxu0 %v324
    %344 = vmatprep.subr.mxu0 0.0
    %345 = vmatpush1.msra.mxu0 %v325
    %346 = vmatprep.subr.mxu0 0.0
    %347 = vmatpush1.msra.mxu0 %v326
    %348 = vmatprep.subr.mxu0 0.0
    %349 = vmatpush1.msra.mxu0 %v327
    %350 = vmatprep.subr.mxu0 0.0
    %351 = vmatpush1.msra.mxu0 %v328
    %352 = vmatprep.subr.mxu0 0.0
    %353 = vmatpush1.msra.mxu0 0.0
    %354 = vmatprep.subr.mxu0 0.0
    %355 = vmatpush1.msra.mxu0 0.0
    %356 = vmatprep.subr.mxu0 0.0
    %357 = vmatpush1.msra.mxu0 0.0
    %358 = vmatprep.subr.mxu0 0.0
    %359 = vmatpush1.msra.mxu0 0.0
    %360 = vmatprep.subr.mxu0 0.0
    %361 = vmatpush1.msra.mxu0 0.0
    %362 = vmatprep.subr.mxu0 0.0
    %363 = vmatpush1.msra.mxu0 0.0
    %364 = vmatprep.subr.mxu0 0.0
    %365 = vmatpush1.msra.mxu0 0.0
    %366 = vmatprep.subr.mxu0 0.0
    %367 = vmatpush1.msra.mxu0 0.0
    %368 = vmatprep.subr.mxu0 0.0
    %369 = vmatpush1.msra.mxu0 0.0
    %370 = vmatprep.subr.mxu0 0.0
    %371 = vmatpush1.msra.mxu0 0.0
    %372 = vmatprep.subr.mxu0 0.0
    %373 = vmatpush1.msra.mxu0 0.0
    %374 = vmatprep.subr.mxu0 0.0
    %375 = vmatpush1.msra.mxu0 0.0
    %376 = vmatprep.subr.mxu0 0.0
    %377 = vmatpush1.msra.mxu0 0.0
    %378 = vmatprep.subr.mxu0 0.0
    %379 = vmatpush1.msra.mxu0 0.0
    %380 = vmatprep.subr.mxu0 0.0
    %381 = vmatpush1.msra.mxu0 0.0
    %382 = vmatprep.subr.mxu0 0.0
    %383 = vmatpush1.msra.mxu0 0.0
    %384 = vmatprep.subr.mxu0 0.0
    %385 = vmatpush1.msra.mxu0 0.0
    %386 = vmatprep.subr.mxu0 0.0
    %387 = vmatpush1.msra.mxu0 0.0
    %388 = vmatprep.subr.mxu0 0.0
    %389 = vmatpush1.msra.mxu0 0.0
    %390 = vmatprep.subr.mxu0 0.0
    %391 = vmatpush1.msra.mxu0 0.0
    %392 = vmatprep.subr.mxu0 0.0
    %393 = vmatpush1.msra.mxu0 0.0
    %394 = vmatprep.subr.mxu0 0.0
    %395 = vmatpush1.msra.mxu0 0.0
    %396 = vmatprep.subr.mxu0 0.0
    %397 = vmatpush1.msra.mxu0 0.0
    %398 = vmatprep.subr.mxu0 0.0
    %399 = vmatpush1.msra.mxu0 0.0
    %400 = vmatprep.mubr.f32.mxu0 0.0
    %401 = vmatmul.mubr.f32.gmra.mrb[0].mxu0 %v249
    %v402 = vpop.f32.mrb[0].mxu0
    %v403 = vadd.f32 %v334, %v402
    %v404 = vpop.f32.mrb[0].mxu0
    %405 = vdwg.mxu0
    %v406 = vtanh.pop %v403
    %v407 = vld [vmem:[%s9] sm:$0xff]
    %v408 = vld [vmem:[%s9 + $0x8] sm:$0xff]
    %v409 = vld [vmem:[%s9 + $0x10] sm:$0xff]
    %v410 = vld [vmem:[%s9 + $0x18] sm:$0xff]
    %v411 = vld [vmem:[%s9 + $0x20] sm:$0xff]
    %v412 = vld [vmem:[%s9 + $0x28] sm:$0xff]
    %v413 = vld [vmem:[%s9 + $0x30] sm:$0xff]
    %v414 = vld [vmem:[%s9 + $0x38] sm:$0xff]
    %v415 = vld [vmem:[%s10] sm:$0x1]
    %v417 = vlaneseq
    %v418 = vshrl.u32 %v417, 7
    %v419 = vsub.s32 0, %v418
    %v420 = vrot.slane %v415, %v419
    %v423 = vsel %vm64, %v406, 0
    %425 = vmatprep.subr.mxu0 0.0
    %426 = vmatpush1.msra.mxu0 %v407
    %427 = vmatprep.subr.mxu0 0.0
    %428 = vmatpush1.msra.mxu0 %v408
    %429 = vmatprep.subr.mxu0 0.0
    %430 = vmatpush1.msra.mxu0 %v409
    %431 = vmatprep.subr.mxu0 0.0
    %432 = vmatpush1.msra.mxu0 %v410
    %433 = vmatprep.subr.mxu0 0.0
    %434 = vmatpush1.msra.mxu0 %v411
    %435 = vmatprep.subr.mxu0 0.0
    %436 = vmatpush1.msra.mxu0 %v412
    %437 = vmatprep.subr.mxu0 0.0
    %438 = vmatpush1.msra.mxu0 %v413
    %439 = vmatprep.subr.mxu0 0.0
    %440 = vmatpush1.msra.mxu0 %v414
    %441 = vmatprep.subr.mxu0 0.0
    %442 = vmatpush1.msra.mxu0 0.0
    %443 = vmatprep.subr.mxu0 0.0
    %444 = vmatpush1.msra.mxu0 0.0
    %445 = vmatprep.subr.mxu0 0.0
    %446 = vmatpush1.msra.mxu0 0.0
    %447 = vmatprep.subr.mxu0 0.0
    %448 = vmatpush1.msra.mxu0 0.0
    %449 = vmatprep.subr.mxu0 0.0
    %450 = vmatpush1.msra.mxu0 0.0
    %451 = vmatprep.subr.mxu0 0.0
    %452 = vmatpush1.msra.mxu0 0.0
    %453 = vmatprep.subr.mxu0 0.0
    %454 = vmatpush1.msra.mxu0 0.0
    %455 = vmatprep.subr.mxu0 0.0
    %456 = vmatpush1.msra.mxu0 0.0
    %457 = vmatprep.subr.mxu0 0.0
    %458 = vmatpush1.msra.mxu0 0.0
    %459 = vmatprep.subr.mxu0 0.0
    %460 = vmatpush1.msra.mxu0 0.0
    %461 = vmatprep.subr.mxu0 0.0
    %462 = vmatpush1.msra.mxu0 0.0
    %463 = vmatprep.subr.mxu0 0.0
    %464 = vmatpush1.msra.mxu0 0.0
    %465 = vmatprep.subr.mxu0 0.0
    %466 = vmatpush1.msra.mxu0 0.0
    %467 = vmatprep.subr.mxu0 0.0
    %468 = vmatpush1.msra.mxu0 0.0
    %469 = vmatprep.subr.mxu0 0.0
    %470 = vmatpush1.msra.mxu0 0.0
    %471 = vmatprep.subr.mxu0 0.0
    %472 = vmatpush1.msra.mxu0 0.0
    %473 = vmatprep.subr.mxu0 0.0
    %474 = vmatpush1.msra.mxu0 0.0
    %475 = vmatprep.subr.mxu0 0.0
    %476 = vmatpush1.msra.mxu0 0.0
    %477 = vmatprep.subr.mxu0 0.0
    %478 = vmatpush1.msra.mxu0 0.0
    %479 = vmatprep.subr.mxu0 0.0
    %480 = vmatpush1.msra.mxu0 0.0
    %481 = vmatprep.subr.mxu0 0.0
    %482 = vmatpush1.msra.mxu0 0.0
    %483 = vmatprep.subr.mxu0 0.0
    %484 = vmatpush1.msra.mxu0 0.0
    %485 = vmatprep.subr.mxu0 0.0
    %486 = vmatpush1.msra.mxu0 0.0
    %487 = vmatprep.subr.mxu0 0.0
    %488 = vmatpush1.msra.mxu0 0.0
    %489 = vmatprep.mubr.f32.mxu0 0.0
    %490 = vmatmul.mubr.f32.gmra.mrb[0].mxu0 %v423
    %v491 = vpop.f32.mrb[0].mxu0
    %v492 = vadd.f32 %v420, %v491
    %v493 = vpop.f32.mrb[0].mxu0
    %494 = vdwg.mxu0
    %v495 = vtanh.pop %v492
    %v496 = vld [vmem:[%s11] sm:$0xff]
    %v497 = vld [vmem:[%s11 + $0x8] sm:$0xff]
    %v498 = vld [vmem:[%s11 + $0x10] sm:$0xff]
    %v499 = vld [vmem:[%s11 + $0x18] sm:$0xff]
    %v500 = vld [vmem:[%s11 + $0x20] sm:$0xff]
    %v501 = vld [vmem:[%s11 + $0x28] sm:$0xff]
    %v502 = vld [vmem:[%s11 + $0x30] sm:$0xff]
    %v503 = vld [vmem:[%s11 + $0x38] sm:$0xff]
    %v504 = vld [vmem:[%s11 + $0x40] sm:$0xff]
    %v505 = vld [vmem:[%s11 + $0x48] sm:$0xff]
    %v506 = vld [vmem:[%s11 + $0x50] sm:$0xff]
    %v507 = vld [vmem:[%s11 + $0x58] sm:$0xff]
    %v508 = vld [vmem:[%s11 + $0x60] sm:$0xff]
    %v509 = vld [vmem:[%s11 + $0x68] sm:$0xff]
    %v510 = vld [vmem:[%s11 + $0x70] sm:$0xff]
    %v511 = vld [vmem:[%s11 + $0x78] sm:$0xff]
    %v512 = vld [vmem:[%s12] sm:$0x1]
    %v514 = vlaneseq
    %v515 = vshrl.u32 %v514, 7
    %v516 = vsub.s32 0, %v515
    %v517 = vrot.slane %v512, %v516
    %519 = vmatprep.subr.mxu0 0.0
    %520 = vmatpush1.msra.mxu0 %v496
    %521 = vmatprep.subr.mxu0 0.0
    %522 = vmatpush1.msra.mxu0 %v497
    %523 = vmatprep.subr.mxu0 0.0
    %524 = vmatpush1.msra.mxu0 %v498
    %525 = vmatprep.subr.mxu0 0.0
    %526 = vmatpush1.msra.mxu0 %v499
    %527 = vmatprep.subr.mxu0 0.0
    %528 = vmatpush1.msra.mxu0 %v500
    %529 = vmatprep.subr.mxu0 0.0
    %530 = vmatpush1.msra.mxu0 %v501
    %531 = vmatprep.subr.mxu0 0.0
    %532 = vmatpush1.msra.mxu0 %v502
    %533 = vmatprep.subr.mxu0 0.0
    %534 = vmatpush1.msra.mxu0 %v503
    %535 = vmatprep.subr.mxu0 0.0
    %536 = vmatpush1.msra.mxu0 %v504
    %537 = vmatprep.subr.mxu0 0.0
    %538 = vmatpush1.msra.mxu0 %v505
    %539 = vmatprep.subr.mxu0 0.0
    %540 = vmatpush1.msra.mxu0 %v506
    %541 = vmatprep.subr.mxu0 0.0
    %542 = vmatpush1.msra.mxu0 %v507
    %543 = vmatprep.subr.mxu0 0.0
    %544 = vmatpush1.msra.mxu0 %v508
    %545 = vmatprep.subr.mxu0 0.0
    %546 = vmatpush1.msra.mxu0 %v509
    %547 = vmatprep.subr.mxu0 0.0
    %548 = vmatpush1.msra.mxu0 %v510
    %549 = vmatprep.subr.mxu0 0.0
    %550 = vmatpush1.msra.mxu0 %v511
    %551 = vmatprep.subr.mxu0 0.0
    %552 = vmatpush1.msra.mxu0 0.0
    %553 = vmatprep.subr.mxu0 0.0
    %554 = vmatpush1.msra.mxu0 0.0
    %555 = vmatprep.subr.mxu0 0.0
    %556 = vmatpush1.msra.mxu0 0.0
    %557 = vmatprep.subr.mxu0 0.0
    %558 = vmatpush1.msra.mxu0 0.0
    %559 = vmatprep.subr.mxu0 0.0
    %560 = vmatpush1.msra.mxu0 0.0
    %561 = vmatprep.subr.mxu0 0.0
    %562 = vmatpush1.msra.mxu0 0.0
    %563 = vmatprep.subr.mxu0 0.0
    %564 = vmatpush1.msra.mxu0 0.0
    %565 = vmatprep.subr.mxu0 0.0
    %566 = vmatpush1.msra.mxu0 0.0
    %567 = vmatprep.subr.mxu0 0.0
    %568 = vmatpush1.msra.mxu0 0.0
    %569 = vmatprep.subr.mxu0 0.0
    %570 = vmatpush1.msra.mxu0 0.0
    %571 = vmatprep.subr.mxu0 0.0
    %572 = vmatpush1.msra.mxu0 0.0
    %573 = vmatprep.subr.mxu0 0.0
    %574 = vmatpush1.msra.mxu0 0.0
    %575 = vmatprep.subr.mxu0 0.0
    %576 = vmatpush1.msra.mxu0 0.0
    %577 = vmatprep.subr.mxu0 0.0
    %578 = vmatpush1.msra.mxu0 0.0
    %579 = vmatprep.subr.mxu0 0.0
    %580 = vmatpush1.msra.mxu0 0.0
    %581 = vmatprep.subr.mxu0 0.0
    %582 = vmatpush1.msra.mxu0 0.0
    %583 = vmatprep.mubr.f32.mxu0 0.0
    %584 = vmatmul.mubr.f32.gmra.mrb[0].mxu0 %v495
    %v585 = vpop.f32.mrb[0].mxu0
    %v586 = vadd.f32 %v517, %v585
    %v587 = vpop.f32.mrb[0].mxu0
    %588 = vdwg.mxu0
    %v589 = vsub.f32 %v48, %v586
    %v590 = vmul.f32 %v589, %v589
    %v592 = vsel %vm64, 1.0, 0
    %v595 = vsel %vm64, %v590, 0
    %597 = vmatprep.subr.mxu0 0.0
    %598 = vmatpush1.xpose.msra.mxu0 %v595
    %599 = vmatprep.subr.mxu0 0.0
    %600 = vmatpush1.xpose.msra.mxu0 0.0
    %601 = vmatprep.subr.mxu0 0.0
    %602 = vmatpush1.xpose.msra.mxu0 0.0
    %603 = vmatprep.subr.mxu0 0.0
    %604 = vmatpush1.xpose.msra.mxu0 0.0
    %605 = vmatprep.subr.mxu0 0.0
    %606 = vmatpush1.xpose.msra.mxu0 0.0
    %607 = vmatprep.subr.mxu0 0.0
    %608 = vmatpush1.xpose.msra.mxu0 0.0
    %609 = vmatprep.subr.mxu0 0.0
    %610 = vmatpush1.xpose.msra.mxu0 0.0
    %611 = vmatprep.subr.mxu0 0.0
    %612 = vmatpush1.xpose.msra.mxu0 0.0
    %613 = vmatprep.subr.mxu0 0.0
    %614 = vmatpush1.xpose.msra.mxu0 0.0
    %615 = vmatprep.subr.mxu0 0.0
    %616 = vmatpush1.xpose.msra.mxu0 0.0
    %617 = vmatprep.subr.mxu0 0.0
    %618 = vmatpush1.xpose.msra.mxu0 0.0
    %619 = vmatprep.subr.mxu0 0.0
    %620 = vmatpush1.xpose.msra.mxu0 0.0
    %621 = vmatprep.subr.mxu0 0.0
    %622 = vmatpush1.xpose.msra.mxu0 0.0
    %623 = vmatprep.subr.mxu0 0.0
    %624 = vmatpush1.xpose.msra.mxu0 0.0
    %625 = vmatprep.subr.mxu0 0.0
    %626 = vmatpush1.xpose.msra.mxu0 0.0
    %627 = vmatprep.subr.mxu0 0.0
    %628 = vmatpush1.xpose.msra.mxu0 0.0
    %629 = vmatprep.subr.mxu0 0.0
    %630 = vmatpush1.xpose.msra.mxu0 0.0
    %631 = vmatprep.subr.mxu0 0.0
    %632 = vmatpush1.xpose.msra.mxu0 0.0
    %633 = vmatprep.subr.mxu0 0.0
    %634 = vmatpush1.xpose.msra.mxu0 0.0
    %635 = vmatprep.subr.mxu0 0.0
    %636 = vmatpush1.xpose.msra.mxu0 0.0
    %637 = vmatprep.subr.mxu0 0.0
    %638 = vmatpush1.xpose.msra.mxu0 0.0
    %639 = vmatprep.subr.mxu0 0.0
    %640 = vmatpush1.xpose.msra.mxu0 0.0
    %641 = vmatprep.subr.mxu0 0.0
    %642 = vmatpush1.xpose.msra.mxu0 0.0
    %643 = vmatprep.subr.mxu0 0.0
    %644 = vmatpush1.xpose.msra.mxu0 0.0
    %645 = vmatprep.subr.mxu0 0.0
    %646 = vmatpush1.xpose.msra.mxu0 0.0
    %647 = vmatprep.subr.mxu0 0.0
    %648 = vmatpush1.xpose.msra.mxu0 0.0
    %649 = vmatprep.subr.mxu0 0.0
    %650 = vmatpush1.xpose.msra.mxu0 0.0
    %651 = vmatprep.subr.mxu0 0.0
    %652 = vmatpush1.xpose.msra.mxu0 0.0
    %653 = vmatprep.subr.mxu0 0.0
    %654 = vmatpush1.xpose.msra.mxu0 0.0
    %655 = vmatprep.subr.mxu0 0.0
    %656 = vmatpush1.xpose.msra.mxu0 0.0
    %657 = vmatprep.subr.mxu0 0.0
    %658 = vmatpush1.xpose.msra.mxu0 0.0
    %659 = vmatprep.subr.mxu0 0.0
    %660 = vmatpush1.xpose.msra.mxu0 0.0
    %661 = vmatprep.mubr.f32.mxu0 0.0
    %662 = vmatmul.mubr.f32.gmra.mrb[0].mxu0 %v592
    %v663 = vpop.f32.mrb[0].mxu0
    %v664 = vadd.f32 0.0, %v663
    %v665 = vpop.f32.mrb[0].mxu0
    %666 = vdwg.mxu0
    %v667 = vmul.f32 %v664, 0.0078125
    %vm668 = vcmask 261120
    %669 = vst.msk [vmem:[#allocation2] sm:$0xff] %vm668, %v318
    %vm670 = vcmask 57344
    %671 = vst.msk [vmem:[#allocation4] sm:$0x1] %vm670, %v667
    // Predicated region
    $region54: #{tpu_custom_call.1} parent=1 // pred_check
      _
    $region55: #{tpu_custom_call.1} parent=1 // pred_check_branch
      %673 = sbr.rel (0) target = $region57
    $region56: #{tpu_custom_call.1} parent=1 // pred_region
      %s675 = ssub.s32 128, 128
      %676 = vsyncadd [#allocation3], %s675
      %s678 = sshll.u32 [#allocation2], 4
      %s679 = int_to_ptr.vmem [resolvable:$true] %s678
      %681 = dma.vmem_to_hbm [thread:$0]  %s679, 128, %s13, [#allocation3]
    $region57: #{tpu_custom_call.1} parent=1 // pred_fallthru
      _
    // Predicated region
    $region58: #{tpu_custom_call.1} parent=1 // pred_check
      _
    $region59: #{tpu_custom_call.1} parent=1 // pred_check_branch
      %683 = sbr.rel (0) target = $region61
    $region60: #{tpu_custom_call.1} parent=1 // pred_region
      %s685 = ssub.s32 16, 16
      %686 = vsyncadd [#allocation5], %s685
      %s688 = sshll.u32 [#allocation4], 4
      %s689 = int_to_ptr.vmem [resolvable:$true] %s688
      %691 = dma.vmem_to_hbm [thread:$0]  %s689, 16, %s14, [#allocation5]
    $region61: #{tpu_custom_call.1} parent=1 // pred_fallthru
      _
    // Predicated region
    $region62: #{tpu_custom_call.1} parent=1 // pred_check
      _
    $region63: #{tpu_custom_call.1} parent=1 // pred_check_branch
      %693 = sbr.rel (0) target = $region65
    $region64: #{tpu_custom_call.1} parent=1 // pred_region
      %694 = dma.done [#allocation3], 128
    $region65: #{tpu_custom_call.1} parent=1 // pred_fallthru
      _
    // Predicated region
    $region66: #{tpu_custom_call.1} parent=1 // pred_check
      _
    $region67: #{tpu_custom_call.1} parent=1 // pred_check_branch
      %696 = sbr.rel (0) target = $region69
    $region68: #{tpu_custom_call.1} parent=1 // pred_region
      %697 = dma.done [#allocation5], 16
    $region69: #{tpu_custom_call.1} parent=1 // pred_fallthru
      _
    %698 = vsyncpa [#allocation3], 1
    %699 = vsyncpa [#allocation5], 1

</llo_original>
